<compile_context>
chip_gen: v5e
topology: v5e:2x2
jax: 0.10.0
libtpu: 0.0.40
codegen_flags: <defaults>
</compile_context>

<pallas_src>
import jax
import jax.numpy as jnp
from jax.experimental import pallas as pl
from jax.experimental.pallas import tpu as pltpu

EPS = 1e-5


def _round_up(n, m):
    return ((n + m - 1) // m) * m


# --------------------------------------------------------------------------
# Kernel: one batch tile per grid step.  Weights stay resident in VMEM.
# --------------------------------------------------------------------------
def _mlp_kernel(x_ref, w1_ref, w2_ref, w3_ref, w4t_ref, bias_ref, o_ref):
    cdt = w1_ref.dtype                       # matmul compute dtype (f32 or bf16)
    h1w = w1_ref.shape[1]
    h2w = w2_ref.shape[1]
    h3w = w3_ref.shape[1]

    # Layer 1: Linear + ReLU   (BN1 already folded into w2/b2)
    h = jnp.dot(x_ref[...], w1_ref[...], preferred_element_type=jnp.float32)
    h = jnp.maximum(h + bias_ref[0:1, 0:h1w], 0.0)

    # Layer 2: (BN-folded) Linear + ReLU
    h = jnp.dot(h.astype(cdt), w2_ref[...], preferred_element_type=jnp.float32)
    h = jnp.maximum(h + bias_ref[1:2, 0:h2w], 0.0)

    # Layer 3: (BN-folded) Linear + ReLU
    h = jnp.dot(h.astype(cdt), w3_ref[...], preferred_element_type=jnp.float32)
    h = jnp.maximum(h + bias_ref[2:3, 0:h3w], 0.0)

    # Output layer, lane-dense: (1, H3) @ (H3, tile_B) -> (1, tile_B)
    out_t = jnp.dot(w4t_ref[...], h.T.astype(cdt),
                    preferred_element_type=jnp.float32)
    o_ref[...] = (out_t + bias_ref[3:4, 0:1]).astype(o_ref.dtype)


# --------------------------------------------------------------------------
# Param preparation: fold eval-mode BatchNorm into adjacent Linears, pack biases.
# --------------------------------------------------------------------------
def fold_params(params, compute_dtype=jnp.float32):
    (w1, b1, g1, be1, m1, v1,
     w2, b2, g2, be2, m2, v2,
     w3, b3, g3, be3, m3, v3,
     w4, b4) = params

    def scale_shift(g, be, m, v):
        s = g / jnp.sqrt(v + EPS)            # (1, units)
        t = be - m * s                       # (1, units)
        return s, t

    s1, t1 = scale_shift(g1, be1, m1, v1)
    s2, t2 = scale_shift(g2, be2, m2, v2)
    s3, t3 = scale_shift(g3, be3, m3, v3)

    # BN_k is affine on the k-th hidden activation -> fold into the NEXT Linear.
    w2f = w2 * s1.T
    b2f = b2 + t1 @ w2
    w3f = w3 * s2.T
    b3f = b3 + t2 @ w3
    w4f = w4 * s3.T
    b4f = b4 + t3 @ w4

    h1, h2, h3 = w1.shape[1], w2f.shape[1], w3f.shape[1]
    lb = _round_up(max(h1, h2, h3, 1), 128)
    bias = jnp.zeros((8, lb), jnp.float32)
    bias = bias.at[0, :h1].set(b1[0])
    bias = bias.at[1, :h2].set(b2f[0])
    bias = bias.at[2, :h3].set(b3f[0])
    bias = bias.at[3, 0].set(b4f[0, 0])

    cdt = compute_dtype
    return (w1.astype(cdt), w2f.astype(cdt), w3f.astype(cdt),
            w4f.T.astype(cdt),               # (1, H3): final layer stored transposed
            bias)                            # biases stay f32


# --------------------------------------------------------------------------
# Wrapper: batch-tiled grid, resident weights, lane-dense transposed output.
# --------------------------------------------------------------------------
def surrogate_model_forward(x, folded_params, *, tile_b=512):
    w1, w2, w3, w4t, bias = folded_params
    cdt = w1.dtype
    B, D = x.shape

    # tile_b must be a multiple of 128 so the (1, tile_b) output block and the
    # (tile_b, D) input block satisfy TPU tiling constraints for any grid size.
    tile_b = max(128, (tile_b // 128) * 128)
    b_pad = _round_up(B, tile_b)
    num_tiles = b_pad // tile_b

    xp = x.astype(cdt)
    if b_pad != B:
        xp = jnp.pad(xp, ((0, b_pad - B), (0, 0)))   # padded rows sliced off below

    const = lambda i: (0, 0)                 # weights: same block every step -> resident
    grid_spec = pltpu.PrefetchScalarGridSpec(
        num_scalar_prefetch=0,
        grid=(num_tiles,),
        in_specs=[
            pl.BlockSpec((tile_b, D), lambda i: (i, 0)),   # x: batch-tiled
            pl.BlockSpec(w1.shape, const),
            pl.BlockSpec(w2.shape, const),
            pl.BlockSpec(w3.shape, const),
            pl.BlockSpec(w4t.shape, const),
            pl.BlockSpec(bias.shape, const),
        ],
        # lane-dense output: each grid step writes a (1, tile_b) block
        out_specs=pl.BlockSpec((1, tile_b), lambda i: (0, i)),
    )
    # VMEM budget (guardrail for v7x 64 MiB): 2*tile_b*D*dtype (x) +
    # 2*tile_b*4 (out) + ~60 KiB weights -- comfortably within default limits here.
    out_t = pl.pallas_call(
        _mlp_kernel,
        out_shape=jax.ShapeDtypeStruct((1, b_pad), jnp.float32),
        grid_spec=grid_spec,
        compiler_params=pltpu.CompilerParams(
            dimension_semantics=("parallel",)),   # shards across v7x's 2 TCs
    )(xp, w1, w2, w3, w4t, bias)
    return out_t[0, :B].reshape(B, 1)


# --------------------------------------------------------------------------
# Parameter init (matches the PyTorch module's shapes) + plain-JAX reference.
# --------------------------------------------------------------------------
def init_params(key, input_dim, hidden_layers=(128, 64, 32)):
    params = []
    prev = input_dim
    for units in hidden_layers:
        key, kw, kb, km, kv = jax.random.split(key, 5)
        bound = 1.0 / jnp.sqrt(prev)
        w = jax.random.uniform(kw, (prev, units), jnp.float32, -bound, bound)
        b = jax.random.uniform(kb, (1, units), jnp.float32, -bound, bound)
        gamma = jnp.ones((1, units), jnp.float32)
        beta = jnp.zeros((1, units), jnp.float32)
        rmean = 0.1 * jax.random.normal(km, (1, units), jnp.float32)
        rvar = 1.0 + 0.1 * jax.random.uniform(kv, (1, units), jnp.float32)
        params += [w, b, gamma, beta, rmean, rvar]
        prev = units
    key, kw, kb = jax.random.split(key, 3)
    bound = 1.0 / jnp.sqrt(prev)
    w_out = jax.random.uniform(kw, (prev, 1), jnp.float32, -bound, bound)
    b_out = jax.random.uniform(kb, (1, 1), jnp.float32, -bound, bound)
    params += [w_out, b_out]
    return params


def reference_forward(x, params):
    h = x
    for i in range(3):
        w, b, g, be, m, v = params[6 * i: 6 * i + 6]
        h = jnp.maximum(h @ w + b, 0.0)
        h = (h - m) / jnp.sqrt(v + EPS) * g + be
    w4, b4 = params[-2], params[-1]
    return h @ w4 + b4


if __name__ == "__main__":
    key = jax.random.PRNGKey(0)
    key, kx = jax.random.split(key)

    batch, input_dim = 200, 32          # non-multiple of tile_b -> exercises padding path
    x = jax.random.normal(kx, (batch, input_dim), jnp.float32)
    params = init_params(key, input_dim, hidden_layers=(128, 64, 32))

    ref = reference_forward(x, params)

    # f32 matmul path (tight tolerance)
    folded_f32 = fold_params(params, jnp.float32)
    out = surrogate_model_forward(x, folded_f32, tile_b=128)
    out = jax.block_until_ready(out)
    assert out.shape == (batch, 1)
    assert jnp.allclose(out, ref, atol=1e-4, rtol=1e-4), "f32 mismatch vs reference"

    # bf16 matmul path with f32 accumulation (relaxed tolerance)
    folded_bf16 = fold_params(params, jnp.bfloat16)
    out_bf16 = surrogate_model_forward(x, folded_bf16, tile_b=128)
    out_bf16 = jax.block_until_ready(out_bf16)
    assert float(jnp.max(jnp.abs(out_bf16 - ref))) < 0.1, "bf16 mismatch vs reference"

    print("KERNEL_OK")
</pallas_src>

<mosaic_0001>
module attributes {stable_mosaic.version = 11 : i64} {
  func.func @_mlp_kernel(%arg0: i32, %arg1: memref<128x32xf32, #tpu.memory_space<vmem>>, %arg2: memref<32x128xf32, #tpu.memory_space<vmem>>, %arg3: memref<128x64xf32, #tpu.memory_space<vmem>>, %arg4: memref<64x32xf32, #tpu.memory_space<vmem>>, %arg5: memref<1x32xf32, #tpu.memory_space<vmem>>, %arg6: memref<8x128xf32, #tpu.memory_space<vmem>>, %arg7: memref<1x128xf32, #tpu.memory_space<vmem>>) attributes {dimension_semantics = [#tpu.dimension_semantics<parallel>], iteration_bounds = array<i64: 2>, scalar_prefetch = 0 : i64, scratch_operands = 0 : i64, tpu.core_type = #tpu.core_type<tc>, window_params = [{transform_indices = @transform_0, window_bounds = array<i64: 128, 32>}, {pipeline_mode = #tpu.pipeline_mode<synchronous>, transform_indices = @transform_1, window_bounds = array<i64: 32, 128>}, {pipeline_mode = #tpu.pipeline_mode<synchronous>, transform_indices = @transform_2, window_bounds = array<i64: 128, 64>}, {pipeline_mode = #tpu.pipeline_mode<synchronous>, transform_indices = @transform_3, window_bounds = array<i64: 64, 32>}, {pipeline_mode = #tpu.pipeline_mode<synchronous>, transform_indices = @transform_4, window_bounds = array<i64: 1, 32>}, {pipeline_mode = #tpu.pipeline_mode<synchronous>, transform_indices = @transform_5, window_bounds = array<i64: 8, 128>}, {transform_indices = @transform_6, window_bounds = array<i64: 1, 128>}]} {
    %c0 = arith.constant 0 : index
    %c0_0 = arith.constant 0 : index
    %0 = vector.load %arg1[%c0, %c0_0] : memref<128x32xf32, #tpu.memory_space<vmem>>, vector<128x32xf32>
    %c0_1 = arith.constant 0 : index
    %c0_2 = arith.constant 0 : index
    %1 = vector.load %arg2[%c0_1, %c0_2] : memref<32x128xf32, #tpu.memory_space<vmem>>, vector<32x128xf32>
    %cst = arith.constant dense<0.000000e+00> : vector<128x128xf32>
    %2 = tpu.matmul %0, %1, %cst {dimension_numbers = #tpu.dot_dimension_numbers<[1], [0], [0], [1], [0, 0, 1, 1], [], []>} : vector<128x32xf32>, vector<32x128xf32>, vector<128x128xf32> -> vector<128x128xf32>
    %c0_3 = arith.constant 0 : index
    %c0_4 = arith.constant 0 : index
    %3 = vector.load %arg6[%c0_3, %c0_4] : memref<8x128xf32, #tpu.memory_space<vmem>>, vector<1x128xf32>
    %4 = vector.broadcast %3 : vector<1x128xf32> to vector<128x128xf32>
    %5 = arith.addf %2, %4 : vector<128x128xf32>
    %cst_5 = arith.constant 0.000000e+00 : f32
    %6 = vector.broadcast %cst_5 : f32 to vector<128x128xf32>
    %7 = arith.maximumf %5, %6 : vector<128x128xf32>
    %c0_6 = arith.constant 0 : index
    %c0_7 = arith.constant 0 : index
    %8 = vector.load %arg3[%c0_6, %c0_7] : memref<128x64xf32, #tpu.memory_space<vmem>>, vector<128x64xf32>
    %cst_8 = arith.constant dense<0.000000e+00> : vector<128x64xf32>
    %9 = tpu.matmul %7, %8, %cst_8 {dimension_numbers = #tpu.dot_dimension_numbers<[1], [0], [0], [1], [0, 0, 1, 1], [], []>} : vector<128x128xf32>, vector<128x64xf32>, vector<128x64xf32> -> vector<128x64xf32>
    %c1 = arith.constant 1 : index
    %c0_9 = arith.constant 0 : index
    %10 = vector.load %arg6[%c1, %c0_9] : memref<8x128xf32, #tpu.memory_space<vmem>>, vector<1x64xf32>
    %11 = vector.broadcast %10 : vector<1x64xf32> to vector<128x64xf32>
    %12 = arith.addf %9, %11 : vector<128x64xf32>
    %cst_10 = arith.constant 0.000000e+00 : f32
    %13 = vector.broadcast %cst_10 : f32 to vector<128x64xf32>
    %14 = arith.maximumf %12, %13 : vector<128x64xf32>
    %c0_11 = arith.constant 0 : index
    %c0_12 = arith.constant 0 : index
    %15 = vector.load %arg4[%c0_11, %c0_12] : memref<64x32xf32, #tpu.memory_space<vmem>>, vector<64x32xf32>
    %cst_13 = arith.constant dense<0.000000e+00> : vector<128x32xf32>
    %16 = tpu.matmul %14, %15, %cst_13 {dimension_numbers = #tpu.dot_dimension_numbers<[1], [0], [0], [1], [0, 0, 1, 1], [], []>} : vector<128x64xf32>, vector<64x32xf32>, vector<128x32xf32> -> vector<128x32xf32>
    %c2 = arith.constant 2 : index
    %c0_14 = arith.constant 0 : index
    %17 = vector.load %arg6[%c2, %c0_14] : memref<8x128xf32, #tpu.memory_space<vmem>>, vector<1x32xf32>
    %18 = vector.broadcast %17 : vector<1x32xf32> to vector<128x32xf32>
    %19 = arith.addf %16, %18 : vector<128x32xf32>
    %cst_15 = arith.constant 0.000000e+00 : f32
    %20 = vector.broadcast %cst_15 : f32 to vector<128x32xf32>
    %21 = arith.maximumf %19, %20 : vector<128x32xf32>
    %c0_16 = arith.constant 0 : index
    %c0_17 = arith.constant 0 : index
    %22 = vector.load %arg5[%c0_16, %c0_17] : memref<1x32xf32, #tpu.memory_space<vmem>>, vector<1x32xf32>
    %23 = tpu.transpose %21, [1, 0] : vector<128x32xf32> -> vector<32x128xf32>
    %cst_18 = arith.constant dense<0.000000e+00> : vector<1x128xf32>
    %24 = tpu.matmul %22, %23, %cst_18 {dimension_numbers = #tpu.dot_dimension_numbers<[1], [0], [0], [1], [0, 0, 1, 1], [], []>} : vector<1x32xf32>, vector<32x128xf32>, vector<1x128xf32> -> vector<1x128xf32>
    %c3 = arith.constant 3 : index
    %c0_19 = arith.constant 0 : index
    %25 = vector.load %arg6[%c3, %c0_19] : memref<8x128xf32, #tpu.memory_space<vmem>>, vector<1x1xf32>
    %26 = vector.broadcast %25 : vector<1x1xf32> to vector<1x128xf32>
    %27 = arith.addf %24, %26 : vector<1x128xf32>
    %c0_20 = arith.constant 0 : index
    %c0_21 = arith.constant 0 : index
    %28 = vector.load %arg7[%c0_20, %c0_21] : memref<1x128xf32, #tpu.memory_space<vmem>>, vector<1x128xf32>
    tpu.vector_store %arg7[%c0_20, %c0_21], %27 {strides = array<i32>} : memref<1x128xf32, #tpu.memory_space<vmem>>, vector<1x128xf32>,
    return
  }
  func.func @transform_0(%arg0: i32) -> (i32, i32) {
    %c0_i32 = arith.constant 0 : i32
    %c0_i32_0 = arith.constant 0 : i32
    return %arg0, %c0_i32 : i32, i32
  }
  func.func @transform_1(%arg0: i32) -> (i32, i32) {
    %c0_i32 = arith.constant 0 : i32
    %c0_i32_0 = arith.constant 0 : i32
    %c0_i32_1 = arith.constant 0 : i32
    return %c0_i32, %c0_i32_0 : i32, i32
  }
  func.func @transform_2(%arg0: i32) -> (i32, i32) {
    %c0_i32 = arith.constant 0 : i32
    %c0_i32_0 = arith.constant 0 : i32
    %c0_i32_1 = arith.constant 0 : i32
    return %c0_i32, %c0_i32_0 : i32, i32
  }
  func.func @transform_3(%arg0: i32) -> (i32, i32) {
    %c0_i32 = arith.constant 0 : i32
    %c0_i32_0 = arith.constant 0 : i32
    %c0_i32_1 = arith.constant 0 : i32
    return %c0_i32, %c0_i32_0 : i32, i32
  }
  func.func @transform_4(%arg0: i32) -> (i32, i32) {
    %c0_i32 = arith.constant 0 : i32
    %c0_i32_0 = arith.constant 0 : i32
    %c0_i32_1 = arith.constant 0 : i32
    return %c0_i32, %c0_i32_0 : i32, i32
  }
  func.func @transform_5(%arg0: i32) -> (i32, i32) {
    %c0_i32 = arith.constant 0 : i32
    %c0_i32_0 = arith.constant 0 : i32
    %c0_i32_1 = arith.constant 0 : i32
    return %c0_i32, %c0_i32_0 : i32, i32
  }
  func.func @transform_6(%arg0: i32) -> (i32, i32) {
    %c0_i32 = arith.constant 0 : i32
    %c0_i32_0 = arith.constant 0 : i32
    return %c0_i32, %arg0 : i32, i32
  }
}

</mosaic_0001>

<llo_original>
// kernel: tpu_custom_call.1
$region0: #{tpu_custom_call.1}
  #allocation0 [shape = 'u32[]', space=smem, size = 0x4, offset = 0x4, fixed_abs, tag = 'smem constant byte address 0x4 - core index']
  #allocation1 [shape = 'u32[72,128]{1,0:T(1,128)}', space=vmem, size = 0x9000, scoped, tag = 'internal scratch']
  %s0 = inlined_call_operand.vmem [shape: f32[256,32], index: 0, kind: input, shape index: {}]
  %s1 = inlined_call_operand.vmem [shape: f32[32,128], index: 1, kind: input, shape index: {}]
  %s2 = inlined_call_operand.vmem [shape: f32[128,64], index: 2, kind: input, shape index: {}]
  %s3 = inlined_call_operand.vmem [shape: f32[64,32], index: 3, kind: input, shape index: {}]
  %s4 = inlined_call_operand.vmem [shape: f32[1,32], index: 4, kind: input, shape index: {}]
  %s5 = inlined_call_operand.vmem [shape: f32[8,128], index: 5, kind: input, shape index: {}]
  %s6 = inlined_call_operand.hbm [shape: f32[1,256], index: 6, kind: output, shape index: {}]
  %s7 = sld [smem:[#allocation0]]
  $region57: #{tpu_custom_call.1} parent=0
    _
  %s9 = ssub.s32 1, %s7
  %s10 = scalar_select 0, %s9, %s7
  $region1: #{tpu_custom_call.1} parent=0
    #allocation2 [shape = 'u8[1024]{0}', space=vmem, size = 0x400, scoped, tag = 'output window, operand 0']
    #allocation3 [shape = 's32[2]{0}', space=sflag, size = 0x8, scoped, tag = 'scoped memory for tpu_custom_call.1']
    %11 = vsyncpa [#allocation3], 0
    %s12 = scalar_lea.sflag [#allocation3], 1
    %13 = vsyncpa %s12, 0
    loop: start=0, step=1, limit=4
    $region2: #{tpu_custom_call.1} parent=1 // loop_pre_header
      _
    $region3: #{tpu_custom_call.1} parent=1 // loop_header
      %s15 = sphi 0, %s19
      %p16 = scmp.ge.s32.totalorder %s15, 4
      %s25 = sphi 0, %s27
      %s28 = sphi 0, %s25
      %s29 = sphi 0, %s28
      %s45 = sphi 0, %s29
      %s49 = sphi 0, %s49
      %s51 = sphi 0, %s49
      %s52 = sphi 0, %s51
      %s66 = sphi 0, %s52
      %s70 = sphi 0, %s70
      %s72 = sphi 0, %s70
      %s73 = sphi 0, %s72
      %s87 = sphi 0, %s73
      %s91 = sphi 0, %s91
      %s93 = sphi 0, %s91
      %s94 = sphi 0, %s93
      %s108 = sphi 0, %s94
      %s112 = sphi 0, %s112
      %s114 = sphi 0, %s112
      %s115 = sphi 0, %s114
      %s129 = sphi 0, %s115
      %s133 = sphi 0, %s133
      %s135 = sphi 0, %s133
      %s136 = sphi 0, %s135
      %s150 = sphi 0, %s136
      %s156 = sphi 0, %s158
      %s159 = sphi 0, %s156
      %s160 = sphi 0, %s159
      %s176 = sphi 0, %s160
    $region4: #{tpu_custom_call.1} parent=1 // loop_header_branch
      %18 = sbr.rel (%p16) target = $region8
    $region5: #{tpu_custom_call.1} parent=1 // loop_body
      %s20 = ssub.s32 %s15, 1
      %s21 = ssub.s32 %s15, 2
      %s22 = sadd.s32 %s15, 1
      %s23 = ssub.s32 %s15, %s22
      %p24 = scmp.eq.s32.totalorder %s23, 0
      %s26 = sadd.s32 %s25, 1
      %s27 = scalar_select %p24, %s25, %s26
      %p30 = pneg %p24
      %p31 = scmp.eq.s32.totalorder %s15, 1
      %p32 = por %p30, %p31
      %p33 = scmp.ne.s32.totalorder %s25, %s28
      %p34 = scmp.eq.s32.totalorder %s15, 0
      %p35 = por %p33, %p34
      %p36 = scmp.ne.s32.totalorder %s25, %s28
      %p37 = scmp.eq.s32.totalorder %s20, 1
      %p38 = por %p36, %p37
      %p39 = scmp.ne.s32.totalorder %s28, %s29
      %p40 = scmp.eq.s32.totalorder %s20, 0
      %p41 = por %p39, %p40
      %p42 = scmp.ne.s32.totalorder %s28, %s29
      %p43 = scmp.eq.s32.totalorder %s21, 1
      %p44 = por %p42, %p43
      %p46 = scmp.ne.s32.totalorder %s29, %s45
      %p47 = scmp.eq.s32.totalorder %s21, 0
      %p48 = por %p46, %p47
      %s50 = sadd.s32 %s49, 1
      %p53 = scmp.eq.s32.totalorder %s15, 1
      %p54 = scmp.ne.s32.totalorder %s49, %s51
      %p55 = scmp.eq.s32.totalorder %s15, 0
      %p56 = por %p54, %p55
      %p57 = scmp.ne.s32.totalorder %s49, %s51
      %p58 = scmp.eq.s32.totalorder %s20, 1
      %p59 = por %p57, %p58
      %p60 = scmp.ne.s32.totalorder %s51, %s52
      %p61 = scmp.eq.s32.totalorder %s20, 0
      %p62 = por %p60, %p61
      %p63 = scmp.ne.s32.totalorder %s51, %s52
      %p64 = scmp.eq.s32.totalorder %s21, 1
      %p65 = por %p63, %p64
      %p67 = scmp.ne.s32.totalorder %s52, %s66
      %p68 = scmp.eq.s32.totalorder %s21, 0
      %p69 = por %p67, %p68
      %s71 = sadd.s32 %s70, 1
      %p74 = scmp.eq.s32.totalorder %s15, 1
      %p75 = scmp.ne.s32.totalorder %s70, %s72
      %p76 = scmp.eq.s32.totalorder %s15, 0
      %p77 = por %p75, %p76
      %p78 = scmp.ne.s32.totalorder %s70, %s72
      %p79 = scmp.eq.s32.totalorder %s20, 1
      %p80 = por %p78, %p79
      %p81 = scmp.ne.s32.totalorder %s72, %s73
      %p82 = scmp.eq.s32.totalorder %s20, 0
      %p83 = por %p81, %p82
      %p84 = scmp.ne.s32.totalorder %s72, %s73
      %p85 = scmp.eq.s32.totalorder %s21, 1
      %p86 = por %p84, %p85
      %p88 = scmp.ne.s32.totalorder %s73, %s87
      %p89 = scmp.eq.s32.totalorder %s21, 0
      %p90 = por %p88, %p89
      %s92 = sadd.s32 %s91, 1
      %p95 = scmp.eq.s32.totalorder %s15, 1
      %p96 = scmp.ne.s32.totalorder %s91, %s93
      %p97 = scmp.eq.s32.totalorder %s15, 0
      %p98 = por %p96, %p97
      %p99 = scmp.ne.s32.totalorder %s91, %s93
      %p100 = scmp.eq.s32.totalorder %s20, 1
      %p101 = por %p99, %p100
      %p102 = scmp.ne.s32.totalorder %s93, %s94
      %p103 = scmp.eq.s32.totalorder %s20, 0
      %p104 = por %p102, %p103
      %p105 = scmp.ne.s32.totalorder %s93, %s94
      %p106 = scmp.eq.s32.totalorder %s21, 1
      %p107 = por %p105, %p106
      %p109 = scmp.ne.s32.totalorder %s94, %s108
      %p110 = scmp.eq.s32.totalorder %s21, 0
      %p111 = por %p109, %p110
      %s113 = sadd.s32 %s112, 1
      %p116 = scmp.eq.s32.totalorder %s15, 1
      %p117 = scmp.ne.s32.totalorder %s112, %s114
      %p118 = scmp.eq.s32.totalorder %s15, 0
      %p119 = por %p117, %p118
      %p120 = scmp.ne.s32.totalorder %s112, %s114
      %p121 = scmp.eq.s32.totalorder %s20, 1
      %p122 = por %p120, %p121
      %p123 = scmp.ne.s32.totalorder %s114, %s115
      %p124 = scmp.eq.s32.totalorder %s20, 0
      %p125 = por %p123, %p124
      %p126 = scmp.ne.s32.totalorder %s114, %s115
      %p127 = scmp.eq.s32.totalorder %s21, 1
      %p128 = por %p126, %p127
      %p130 = scmp.ne.s32.totalorder %s115, %s129
      %p131 = scmp.eq.s32.totalorder %s21, 0
      %p132 = por %p130, %p131
      %s134 = sadd.s32 %s133, 1
      %p137 = scmp.eq.s32.totalorder %s15, 1
      %p138 = scmp.ne.s32.totalorder %s133, %s135
      %p139 = scmp.eq.s32.totalorder %s15, 0
      %p140 = por %p138, %p139
      %p141 = scmp.ne.s32.totalorder %s133, %s135
      %p142 = scmp.eq.s32.totalorder %s20, 1
      %p143 = por %p141, %p142
      %p144 = scmp.ne.s32.totalorder %s135, %s136
      %p145 = scmp.eq.s32.totalorder %s20, 0
      %p146 = por %p144, %p145
      %p147 = scmp.ne.s32.totalorder %s135, %s136
      %p148 = scmp.eq.s32.totalorder %s21, 1
      %p149 = por %p147, %p148
      %p151 = scmp.ne.s32.totalorder %s136, %s150
      %p152 = scmp.eq.s32.totalorder %s21, 0
      %p153 = por %p151, %p152
      %s154 = ssub.s32 %s15, %s22
      %p155 = scmp.eq.s32.totalorder %s154, 0
      %s157 = sadd.s32 %s156, 1
      %s158 = scalar_select %p155, %s156, %s157
      %p161 = pneg %p155
      %p162 = scmp.eq.s32.totalorder %s15, 1
      %p163 = por %p161, %p162
      %p164 = scmp.ne.s32.totalorder %s156, %s159
      %p165 = scmp.eq.s32.totalorder %s15, 0
      %p166 = por %p164, %p165
      %p167 = scmp.ne.s32.totalorder %s156, %s159
      %p168 = scmp.eq.s32.totalorder %s20, 1
      %p169 = por %p167, %p168
      %p170 = scmp.ne.s32.totalorder %s159, %s160
      %p171 = scmp.eq.s32.totalorder %s20, 0
      %p172 = por %p170, %p171
      %p173 = scmp.ne.s32.totalorder %s159, %s160
      %p174 = scmp.eq.s32.totalorder %s21, 1
      %p175 = por %p173, %p174
      %p177 = scmp.ne.s32.totalorder %s160, %s176
      %p178 = scmp.eq.s32.totalorder %s21, 0
      %p179 = por %p177, %p178
      %p180 = scmp.le.s32.totalorder 1, %s15
      %p181 = scmp.lt.s32.totalorder %s15, 3
      %p182 = pnand %p180, %p181
      %p183 = pneg %p182
      // Predicated region
      $region9: #{tpu_custom_call.1} parent=5 // pred_check
        _
      $region10: #{tpu_custom_call.1} parent=5 // pred_check_branch
        %185 = sbr.rel (%p182) target = $region12
      $region11: #{tpu_custom_call.1} parent=5 // pred_region
        %s186 = ssub.s32 %s15, 1
        // Predicated region
        $region13: #{tpu_custom_call.1} parent=11 // pred_check
          %p187 = pneg %p62
        $region14: #{tpu_custom_call.1} parent=11 // pred_check_branch
          %189 = sbr.rel (%p187) target = $region16
        $region15: #{tpu_custom_call.1} parent=11 // pred_region
          _
        $region16: #{tpu_custom_call.1} parent=11 // pred_fallthru
          _
        // Predicated region
        $region17: #{tpu_custom_call.1} parent=11 // pred_check
          %p190 = pneg %p83
        $region18: #{tpu_custom_call.1} parent=11 // pred_check_branch
          %192 = sbr.rel (%p190) target = $region20
        $region19: #{tpu_custom_call.1} parent=11 // pred_region
          _
        $region20: #{tpu_custom_call.1} parent=11 // pred_fallthru
          _
        // Predicated region
        $region21: #{tpu_custom_call.1} parent=11 // pred_check
          %p193 = pneg %p104
        $region22: #{tpu_custom_call.1} parent=11 // pred_check_branch
          %195 = sbr.rel (%p193) target = $region24
        $region23: #{tpu_custom_call.1} parent=11 // pred_region
          _
        $region24: #{tpu_custom_call.1} parent=11 // pred_fallthru
          _
        // Predicated region
        $region25: #{tpu_custom_call.1} parent=11 // pred_check
          %p196 = pneg %p125
        $region26: #{tpu_custom_call.1} parent=11 // pred_check_branch
          %198 = sbr.rel (%p196) target = $region28
        $region27: #{tpu_custom_call.1} parent=11 // pred_region
          _
        $region28: #{tpu_custom_call.1} parent=11 // pred_fallthru
          _
        // Predicated region
        $region29: #{tpu_custom_call.1} parent=11 // pred_check
          %p199 = pneg %p146
        $region30: #{tpu_custom_call.1} parent=11 // pred_check_branch
          %201 = sbr.rel (%p199) target = $region32
        $region31: #{tpu_custom_call.1} parent=11 // pred_region
          _
        $region32: #{tpu_custom_call.1} parent=11 // pred_fallthru
          _
      $region12: #{tpu_custom_call.1} parent=5 // pred_fallthru
        _
      %p202 = scmp.lt.s32.totalorder %s15, 2
      // Predicated region
      $region33: #{tpu_custom_call.1} parent=5 // pred_check
        %p203 = pneg %p202
      $region34: #{tpu_custom_call.1} parent=5 // pred_check_branch
        %205 = sbr.rel (%p203) target = $region36
      $region35: #{tpu_custom_call.1} parent=5 // pred_region
        // Predicated region
        $region37: #{tpu_custom_call.1} parent=35 // pred_check
          %p206 = pneg %p35
        $region38: #{tpu_custom_call.1} parent=35 // pred_check_branch
          %208 = sbr.rel (%p206) target = $region40
        $region39: #{tpu_custom_call.1} parent=35 // pred_region
          %s209 = smul.u32 16, %s15
          %p210 = scmp.lt.s32.totalorder %s209, 31
          %s211 = scalar_select %p210, %s209, 31
          %s212 = smul.addr %s211, 8
          %s213 = scalar_lea.vmem %s0, %s212
          %s214 = smul.u32 16, %s15
        $region40: #{tpu_custom_call.1} parent=35 // pred_fallthru
          _
      $region36: #{tpu_custom_call.1} parent=5 // pred_fallthru
        _
      %p215 = scmp.le.s32.totalorder 1, %s15
      %p216 = scmp.lt.s32.totalorder %s15, 3
      %p217 = pnand %p215, %p216
      %p218 = pneg %p217
      // Predicated region
      $region41: #{tpu_custom_call.1} parent=5 // pred_check
        _
      $region42: #{tpu_custom_call.1} parent=5 // pred_check_branch
        %220 = sbr.rel (%p217) target = $region44
      $region43: #{tpu_custom_call.1} parent=5 // pred_region
        %s221 = ssub.s32 %s15, 1
        %s222 = smul.u32 16, %s20
        %p223 = scmp.lt.s32.totalorder %s222, 31
        %s224 = scalar_select %p223, %s222, 31
        %s225 = smul.addr %s224, 8
        %s226 = scalar_lea.vmem %s0, %s225
        %p227 = pneg %p41
        %p228 = pneg %p38
        %p229 = pneg %p62
        %p230 = pneg %p59
        %p231 = pneg %p83
        %p232 = pneg %p80
        %p233 = pneg %p104
        %p234 = pneg %p101
        %p235 = pneg %p125
        %p236 = pneg %p122
        %p237 = pneg %p146
        %p238 = pneg %p143
        %p239 = pneg %p172
        %p240 = pneg %p169
        %s241 = sand.u32 %s159, 1
        %s242 = scalar_lea.sflag [#allocation3], %s241
        %s243 = sand.u32 %s159, 1
        %s244 = scalar_lea.vmem [#allocation2], %s243
        %s245 = smul.u32 16, %s20
        %p246 = scmp.lt.s32.totalorder %s245, 31
        %s247 = scalar_select %p246, %s245, 31
        %s248 = smul.addr %s247, 8
        %s249 = scalar_lea.vmem %s0, %s248
        %s250 = smul.u32 16, %s20
        %v251 = vld [vmem:[%s249] sm:$0xff]
        %v252 = vld [vmem:[%s249 + $0x8] sm:$0xff]
        %v253 = vld [vmem:[%s249 + $0x10] sm:$0xff]
        %v254 = vld [vmem:[%s249 + $0x18] sm:$0xff]
        %v255 = vld [vmem:[%s249 + $0x20] sm:$0xff]
        %v256 = vld [vmem:[%s249 + $0x28] sm:$0xff]
        %v257 = vld [vmem:[%s249 + $0x30] sm:$0xff]
        %v258 = vld [vmem:[%s249 + $0x38] sm:$0xff]
        %v259 = vld [vmem:[%s249 + $0x40] sm:$0xff]
        %v260 = vld [vmem:[%s249 + $0x48] sm:$0xff]
        %v261 = vld [vmem:[%s249 + $0x50] sm:$0xff]
        %v262 = vld [vmem:[%s249 + $0x58] sm:$0xff]
        %v263 = vld [vmem:[%s249 + $0x60] sm:$0xff]
        %v264 = vld [vmem:[%s249 + $0x68] sm:$0xff]
        %v265 = vld [vmem:[%s249 + $0x70] sm:$0xff]
        %v266 = vld [vmem:[%s249 + $0x78] sm:$0xff]
        %v267 = vld [vmem:[%s1] sm:$0xff]
        %v268 = vld [vmem:[%s1 + $0x8] sm:$0xff]
        %v269 = vld [vmem:[%s1 + $0x10] sm:$0xff]
        %v270 = vld [vmem:[%s1 + $0x18] sm:$0xff]
        %v271 = vld [vmem:[%s5] sm:$0x1]
        %v272 = vperm.slane %v271, 0
        %vm273 = vcmask 261120
        %v275 = vsel %vm273, %v251, 0
        %v278 = vsel %vm273, %v252, 0
        %v281 = vsel %vm273, %v253, 0
        %v284 = vsel %vm273, %v254, 0
        %v287 = vsel %vm273, %v255, 0
        %v290 = vsel %vm273, %v256, 0
        %v293 = vsel %vm273, %v257, 0
        %v296 = vsel %vm273, %v258, 0
        %v299 = vsel %vm273, %v259, 0
        %v302 = vsel %vm273, %v260, 0
        %v305 = vsel %vm273, %v261, 0
        %v308 = vsel %vm273, %v262, 0
        %v311 = vsel %vm273, %v263, 0
        %v314 = vsel %vm273, %v264, 0
        %v317 = vsel %vm273, %v265, 0
        %v320 = vsel %vm273, %v266, 0
        %322 = vmatpush.msra.mxu0 0.0
        %323 = vmatpush.msra.mxu0 0.0
        %324 = vmatpush.msra.mxu0 0.0
        %325 = vmatpush.msra.mxu0 0.0
        %326 = vmatpush.msra.mxu0 0.0
        %327 = vmatpush.msra.mxu0 0.0
        %328 = vmatpush.msra.mxu0 0.0
        %329 = vmatpush.msra.mxu0 0.0
        %330 = vmatpush.msra.mxu0 0.0
        %331 = vmatpush.msra.mxu0 0.0
        %332 = vmatpush.msra.mxu0 0.0
        %333 = vmatpush.msra.mxu0 0.0
        %334 = vmatpush.msra.mxu0 %v270
        %335 = vmatpush.msra.mxu0 %v269
        %336 = vmatpush.msra.mxu0 %v268
        %337 = vmatpush.msra.mxu0 %v267
        %338 = vmatmul.f32.gmra.mxu0 %v275
        %v339 = vpop.f32.mrf.mxu0
        %v340 = vadd.f32 %v272, %v339
        %341 = vmatmul.f32.gmra.mxu0 %v278
        %v342 = vpop.f32.mrf.mxu0
        %v343 = vadd.f32 %v272, %v342
        %344 = vmatmul.f32.gmra.mxu0 %v281
        %v345 = vpop.f32.mrf.mxu0
        %v346 = vadd.f32 %v272, %v345
        %347 = vmatmul.f32.gmra.mxu0 %v284
        %v348 = vpop.f32.mrf.mxu0
        %v349 = vadd.f32 %v272, %v348
        %350 = vmatmul.f32.gmra.mxu0 %v287
        %v351 = vpop.f32.mrf.mxu0
        %v352 = vadd.f32 %v272, %v351
        %353 = vmatmul.f32.gmra.mxu0 %v290
        %v354 = vpop.f32.mrf.mxu0
        %v355 = vadd.f32 %v272, %v354
        %356 = vmatmul.f32.gmra.mxu0 %v293
        %v357 = vpop.f32.mrf.mxu0
        %v358 = vadd.f32 %v272, %v357
        %359 = vmatmul.f32.gmra.mxu0 %v296
        %v360 = vpop.f32.mrf.mxu0
        %v361 = vadd.f32 %v272, %v360
        %362 = vmatmul.f32.gmra.mxu0 %v299
        %v363 = vpop.f32.mrf.mxu0
        %v364 = vadd.f32 %v272, %v363
        %365 = vmatmul.f32.gmra.mxu0 %v302
        %v366 = vpop.f32.mrf.mxu0
        %v367 = vadd.f32 %v272, %v366
        %368 = vmatmul.f32.gmra.mxu0 %v305
        %v369 = vpop.f32.mrf.mxu0
        %v370 = vadd.f32 %v272, %v369
        %371 = vmatmul.f32.gmra.mxu0 %v308
        %v372 = vpop.f32.mrf.mxu0
        %v373 = vadd.f32 %v272, %v372
        %374 = vmatmul.f32.gmra.mxu0 %v311
        %v375 = vpop.f32.mrf.mxu0
        %v376 = vadd.f32 %v272, %v375
        %377 = vmatmul.f32.gmra.mxu0 %v314
        %v378 = vpop.f32.mrf.mxu0
        %v379 = vadd.f32 %v272, %v378
        %380 = vmatmul.f32.gmra.mxu0 %v317
        %v381 = vpop.f32.mrf.mxu0
        %v382 = vadd.f32 %v272, %v381
        %383 = vmatmul.f32.gmra.mxu0 %v320
        %v384 = vpop.f32.mrf.mxu0
        %v385 = vadd.f32 %v272, %v384
        %386 = vdwg.mxu0
        %v387 = vmax.f32 %v340, 0.0
        %v388 = vmax.f32 %v343, 0.0
        %v389 = vmax.f32 %v346, 0.0
        %v390 = vmax.f32 %v349, 0.0
        %v391 = vmax.f32 %v352, 0.0
        %v392 = vmax.f32 %v355, 0.0
        %v393 = vmax.f32 %v358, 0.0
        %v394 = vmax.f32 %v361, 0.0
        %v395 = vmax.f32 %v364, 0.0
        %v396 = vmax.f32 %v367, 0.0
        %v397 = vmax.f32 %v370, 0.0
        %v398 = vmax.f32 %v373, 0.0
        %v399 = vmax.f32 %v376, 0.0
        %v400 = vmax.f32 %v379, 0.0
        %v401 = vmax.f32 %v382, 0.0
        %v402 = vmax.f32 %v385, 0.0
        %v403 = vld [vmem:[%s2] sm:$0xff]
        %v404 = vld [vmem:[%s2 + $0x8] sm:$0xff]
        %v405 = vld [vmem:[%s2 + $0x10] sm:$0xff]
        %v406 = vld [vmem:[%s2 + $0x18] sm:$0xff]
        %v407 = vld [vmem:[%s2 + $0x20] sm:$0xff]
        %v408 = vld [vmem:[%s2 + $0x28] sm:$0xff]
        %v409 = vld [vmem:[%s2 + $0x30] sm:$0xff]
        %v410 = vld [vmem:[%s2 + $0x38] sm:$0xff]
        %v411 = vld [vmem:[%s2 + $0x40] sm:$0xff]
        %v412 = vld [vmem:[%s2 + $0x48] sm:$0xff]
        %v413 = vld [vmem:[%s2 + $0x50] sm:$0xff]
        %v414 = vld [vmem:[%s2 + $0x58] sm:$0xff]
        %v415 = vld [vmem:[%s2 + $0x60] sm:$0xff]
        %v416 = vld [vmem:[%s2 + $0x68] sm:$0xff]
        %v417 = vld [vmem:[%s2 + $0x70] sm:$0xff]
        %v418 = vld [vmem:[%s2 + $0x78] sm:$0xff]
        %v419 = vld [vmem:[%s5 + $0x1] sm:$0x1]
        %v420 = vperm.slane %v419, 0
        %421 = vmatpush.msra.mxu0 %v418
        %422 = vmatpush.msra.mxu0 %v417
        %423 = vmatpush.msra.mxu0 %v416
        %424 = vmatpush.msra.mxu0 %v415
        %425 = vmatpush.msra.mxu0 %v414
        %426 = vmatpush.msra.mxu0 %v413
        %427 = vmatpush.msra.mxu0 %v412
        %428 = vmatpush.msra.mxu0 %v411
        %429 = vmatpush.msra.mxu0 %v410
        %430 = vmatpush.msra.mxu0 %v409
        %431 = vmatpush.msra.mxu0 %v408
        %432 = vmatpush.msra.mxu0 %v407
        %433 = vmatpush.msra.mxu0 %v406
        %434 = vmatpush.msra.mxu0 %v405
        %435 = vmatpush.msra.mxu0 %v404
        %436 = vmatpush.msra.mxu0 %v403
        %437 = vmatmul.f32.gmra.mxu0 %v387
        %v438 = vpop.f32.mrf.mxu0
        %v439 = vadd.f32 %v420, %v438
        %440 = vmatmul.f32.gmra.mxu0 %v388
        %v441 = vpop.f32.mrf.mxu0
        %v442 = vadd.f32 %v420, %v441
        %443 = vmatmul.f32.gmra.mxu0 %v389
        %v444 = vpop.f32.mrf.mxu0
        %v445 = vadd.f32 %v420, %v444
        %446 = vmatmul.f32.gmra.mxu0 %v390
        %v447 = vpop.f32.mrf.mxu0
        %v448 = vadd.f32 %v420, %v447
        %449 = vmatmul.f32.gmra.mxu0 %v391
        %v450 = vpop.f32.mrf.mxu0
        %v451 = vadd.f32 %v420, %v450
        %452 = vmatmul.f32.gmra.mxu0 %v392
        %v453 = vpop.f32.mrf.mxu0
        %v454 = vadd.f32 %v420, %v453
        %455 = vmatmul.f32.gmra.mxu0 %v393
        %v456 = vpop.f32.mrf.mxu0
        %v457 = vadd.f32 %v420, %v456
        %458 = vmatmul.f32.gmra.mxu0 %v394
        %v459 = vpop.f32.mrf.mxu0
        %v460 = vadd.f32 %v420, %v459
        %461 = vmatmul.f32.gmra.mxu0 %v395
        %v462 = vpop.f32.mrf.mxu0
        %v463 = vadd.f32 %v420, %v462
        %464 = vmatmul.f32.gmra.mxu0 %v396
        %v465 = vpop.f32.mrf.mxu0
        %v466 = vadd.f32 %v420, %v465
        %467 = vmatmul.f32.gmra.mxu0 %v397
        %v468 = vpop.f32.mrf.mxu0
        %v469 = vadd.f32 %v420, %v468
        %470 = vmatmul.f32.gmra.mxu0 %v398
        %v471 = vpop.f32.mrf.mxu0
        %v472 = vadd.f32 %v420, %v471
        %473 = vmatmul.f32.gmra.mxu0 %v399
        %v474 = vpop.f32.mrf.mxu0
        %v475 = vadd.f32 %v420, %v474
        %476 = vmatmul.f32.gmra.mxu0 %v400
        %v477 = vpop.f32.mrf.mxu0
        %v478 = vadd.f32 %v420, %v477
        %479 = vmatmul.f32.gmra.mxu0 %v401
        %v480 = vpop.f32.mrf.mxu0
        %v481 = vadd.f32 %v420, %v480
        %482 = vmatmul.f32.gmra.mxu0 %v402
        %v483 = vpop.f32.mrf.mxu0
        %v484 = vadd.f32 %v420, %v483
        %485 = vdwg.mxu0
        %v486 = vmax.f32 %v439, 0.0
        %v487 = vmax.f32 %v442, 0.0
        %v488 = vmax.f32 %v445, 0.0
        %v489 = vmax.f32 %v448, 0.0
        %v490 = vmax.f32 %v451, 0.0
        %v491 = vmax.f32 %v454, 0.0
        %v492 = vmax.f32 %v457, 0.0
        %v493 = vmax.f32 %v460, 0.0
        %v494 = vmax.f32 %v463, 0.0
        %v495 = vmax.f32 %v466, 0.0
        %v496 = vmax.f32 %v469, 0.0
        %v497 = vmax.f32 %v472, 0.0
        %v498 = vmax.f32 %v475, 0.0
        %v499 = vmax.f32 %v478, 0.0
        %v500 = vmax.f32 %v481, 0.0
        %v501 = vmax.f32 %v484, 0.0
        %v502 = vld [vmem:[%s3] sm:$0xff]
        %v503 = vld [vmem:[%s3 + $0x8] sm:$0xff]
        %v504 = vld [vmem:[%s3 + $0x10] sm:$0xff]
        %v505 = vld [vmem:[%s3 + $0x18] sm:$0xff]
        %v506 = vld [vmem:[%s3 + $0x20] sm:$0xff]
        %v507 = vld [vmem:[%s3 + $0x28] sm:$0xff]
        %v508 = vld [vmem:[%s3 + $0x30] sm:$0xff]
        %v509 = vld [vmem:[%s3 + $0x38] sm:$0xff]
        %v510 = vld [vmem:[%s5 + $0x2] sm:$0x1]
        %v511 = vperm.slane %v510, 0
        %vm512 = vcmask 523264
        %v514 = vsel %vm512, %v486, 0
        %v517 = vsel %vm512, %v487, 0
        %v520 = vsel %vm512, %v488, 0
        %v523 = vsel %vm512, %v489, 0
        %v526 = vsel %vm512, %v490, 0
        %v529 = vsel %vm512, %v491, 0
        %v532 = vsel %vm512, %v492, 0
        %v535 = vsel %vm512, %v493, 0
        %v538 = vsel %vm512, %v494, 0
        %v541 = vsel %vm512, %v495, 0
        %v544 = vsel %vm512, %v496, 0
        %v547 = vsel %vm512, %v497, 0
        %v550 = vsel %vm512, %v498, 0
        %v553 = vsel %vm512, %v499, 0
        %v556 = vsel %vm512, %v500, 0
        %v559 = vsel %vm512, %v501, 0
        %561 = vmatpush.msra.mxu0 0.0
        %562 = vmatpush.msra.mxu0 0.0
        %563 = vmatpush.msra.mxu0 0.0
        %564 = vmatpush.msra.mxu0 0.0
        %565 = vmatpush.msra.mxu0 0.0
        %566 = vmatpush.msra.mxu0 0.0
        %567 = vmatpush.msra.mxu0 0.0
        %568 = vmatpush.msra.mxu0 0.0
        %569 = vmatpush.msra.mxu0 %v509
        %570 = vmatpush.msra.mxu0 %v508
        %571 = vmatpush.msra.mxu0 %v507
        %572 = vmatpush.msra.mxu0 %v506
        %573 = vmatpush.msra.mxu0 %v505
        %574 = vmatpush.msra.mxu0 %v504
        %575 = vmatpush.msra.mxu0 %v503
        %576 = vmatpush.msra.mxu0 %v502
        %577 = vmatmul.f32.gmra.mxu0 %v514
        %v578 = vpop.f32.mrf.mxu0
        %v579 = vadd.f32 %v511, %v578
        %580 = vmatmul.f32.gmra.mxu0 %v517
        %v581 = vpop.f32.mrf.mxu0
        %v582 = vadd.f32 %v511, %v581
        %583 = vmatmul.f32.gmra.mxu0 %v520
        %v584 = vpop.f32.mrf.mxu0
        %v585 = vadd.f32 %v511, %v584
        %586 = vmatmul.f32.gmra.mxu0 %v523
        %v587 = vpop.f32.mrf.mxu0
        %v588 = vadd.f32 %v511, %v587
        %589 = vmatmul.f32.gmra.mxu0 %v526
        %v590 = vpop.f32.mrf.mxu0
        %v591 = vadd.f32 %v511, %v590
        %592 = vmatmul.f32.gmra.mxu0 %v529
        %v593 = vpop.f32.mrf.mxu0
        %v594 = vadd.f32 %v511, %v593
        %595 = vmatmul.f32.gmra.mxu0 %v532
        %v596 = vpop.f32.mrf.mxu0
        %v597 = vadd.f32 %v511, %v596
        %598 = vmatmul.f32.gmra.mxu0 %v535
        %v599 = vpop.f32.mrf.mxu0
        %v600 = vadd.f32 %v511, %v599
        %601 = vmatmul.f32.gmra.mxu0 %v538
        %v602 = vpop.f32.mrf.mxu0
        %v603 = vadd.f32 %v511, %v602
        %604 = vmatmul.f32.gmra.mxu0 %v541
        %v605 = vpop.f32.mrf.mxu0
        %v606 = vadd.f32 %v511, %v605
        %607 = vmatmul.f32.gmra.mxu0 %v544
        %v608 = vpop.f32.mrf.mxu0
        %v609 = vadd.f32 %v511, %v608
        %610 = vmatmul.f32.gmra.mxu0 %v547
        %v611 = vpop.f32.mrf.mxu0
        %v612 = vadd.f32 %v511, %v611
        %613 = vmatmul.f32.gmra.mxu0 %v550
        %v614 = vpop.f32.mrf.mxu0
        %v615 = vadd.f32 %v511, %v614
        %616 = vmatmul.f32.gmra.mxu0 %v553
        %v617 = vpop.f32.mrf.mxu0
        %v618 = vadd.f32 %v511, %v617
        %619 = vmatmul.f32.gmra.mxu0 %v556
        %v620 = vpop.f32.mrf.mxu0
        %v621 = vadd.f32 %v511, %v620
        %622 = vmatmul.f32.gmra.mxu0 %v559
        %v623 = vpop.f32.mrf.mxu0
        %v624 = vadd.f32 %v511, %v623
        %625 = vdwg.mxu0
        %v626 = vmax.f32 %v579, 0.0
        %v627 = vmax.f32 %v582, 0.0
        %v628 = vmax.f32 %v585, 0.0
        %v629 = vmax.f32 %v588, 0.0
        %v630 = vmax.f32 %v591, 0.0
        %v631 = vmax.f32 %v594, 0.0
        %v632 = vmax.f32 %v597, 0.0
        %v633 = vmax.f32 %v600, 0.0
        %v634 = vmax.f32 %v603, 0.0
        %v635 = vmax.f32 %v606, 0.0
        %v636 = vmax.f32 %v609, 0.0
        %v637 = vmax.f32 %v612, 0.0
        %v638 = vmax.f32 %v615, 0.0
        %v639 = vmax.f32 %v618, 0.0
        %v640 = vmax.f32 %v621, 0.0
        %v641 = vmax.f32 %v624, 0.0
        %v642 = vld [vmem:[%s4] sm:$0x1]
        %v643 = vld [vmem:[%s5 + $0x3] sm:$0x1]
        %645 = vset.pattern.permute.xlu0 0
        %646 = vperm.xlu0 %645, %v643
        %v647 = vpop.permute.xlu0 %646
        %v650 = vsel %vm273, %v642, 0
        %v653 = vsel %vm273, %v626, 0
        %v656 = vsel %vm273, %v627, 0
        %v659 = vsel %vm273, %v628, 0
        %v662 = vsel %vm273, %v629, 0
        %v665 = vsel %vm273, %v630, 0
        %v668 = vsel %vm273, %v631, 0
        %v671 = vsel %vm273, %v632, 0
        %v674 = vsel %vm273, %v633, 0
        %v677 = vsel %vm273, %v634, 0
        %v680 = vsel %vm273, %v635, 0
        %v683 = vsel %vm273, %v636, 0
        %v686 = vsel %vm273, %v637, 0
        %v689 = vsel %vm273, %v638, 0
        %v692 = vsel %vm273, %v639, 0
        %v695 = vsel %vm273, %v640, 0
        %v698 = vsel %vm273, %v641, 0
        %700 = vmatpush.xpose.msra.mxu0 %v698
        %701 = vmatpush.xpose.msra.mxu0 %v695
        %702 = vmatpush.xpose.msra.mxu0 %v692
        %703 = vmatpush.xpose.msra.mxu0 %v689
        %704 = vmatpush.xpose.msra.mxu0 %v686
        %705 = vmatpush.xpose.msra.mxu0 %v683
        %706 = vmatpush.xpose.msra.mxu0 %v680
        %707 = vmatpush.xpose.msra.mxu0 %v677
        %708 = vmatpush.xpose.msra.mxu0 %v674
        %709 = vmatpush.xpose.msra.mxu0 %v671
        %710 = vmatpush.xpose.msra.mxu0 %v668
        %711 = vmatpush.xpose.msra.mxu0 %v665
        %712 = vmatpush.xpose.msra.mxu0 %v662
        %713 = vmatpush.xpose.msra.mxu0 %v659
        %714 = vmatpush.xpose.msra.mxu0 %v656
        %715 = vmatpush.xpose.msra.mxu0 %v653
        %716 = vmatmul.f32.gmra.mxu0 %v650
        %v717 = vpop.f32.mrf.mxu0
        %v718 = vadd.f32 %v647, %v717
        %719 = vdwg.mxu0
        %720 = vst [vmem:[%s244] sm:$0x1] %v718
        %s721 = sand.u32 %s159, 1
        %s722 = scalar_lea.sflag [#allocation3], %s721
        %s723 = sand.u32 %s159, 1
        %s724 = scalar_lea.vmem [#allocation2], %s723
        // Predicated region
        $region45: #{tpu_custom_call.1} parent=43 // pred_check
          %p725 = pneg %p169
        $region46: #{tpu_custom_call.1} parent=43 // pred_check_branch
          %727 = sbr.rel (%p725) target = $region48
        $region47: #{tpu_custom_call.1} parent=43 // pred_region
          %729 = vsyncadd %s722, 0
          %s730 = scalar_lea.hbm %s6, %s20
          %s732 = sshll.u32 %s724, 4
          %s733 = int_to_ptr.vmem [resolvable:$true] %s732
          %s734 = sshll.u32 %s730, 4
          %s735 = int_to_ptr.hbm [resolvable:$true] %s734
          %737 = dma.vmem_to_hbm [thread:$0]  %s733, 16, %s735, %s722
        $region48: #{tpu_custom_call.1} parent=43 // pred_fallthru
          _
      $region44: #{tpu_custom_call.1} parent=5 // pred_fallthru
        _
      %p738 = scmp.le.s32.totalorder 2, %s15
      // Predicated region
      $region49: #{tpu_custom_call.1} parent=5 // pred_check
        %p739 = pneg %p738
      $region50: #{tpu_custom_call.1} parent=5 // pred_check_branch
        %741 = sbr.rel (%p739) target = $region52
      $region51: #{tpu_custom_call.1} parent=5 // pred_region
        %s742 = ssub.s32 %s15, 2
        // Predicated region
        $region53: #{tpu_custom_call.1} parent=51 // pred_check
          %p743 = pneg %p175
        $region54: #{tpu_custom_call.1} parent=51 // pred_check_branch
          %745 = sbr.rel (%p743) target = $region56
        $region55: #{tpu_custom_call.1} parent=51 // pred_region
          %s746 = sand.u32 %s160, 1
          %s747 = scalar_lea.sflag [#allocation3], %s746
          %s748 = sand.u32 %s160, 1
          %s749 = scalar_lea.vmem [#allocation2], %s748
          %751 = dma.done %s747, 16
        $region56: #{tpu_custom_call.1} parent=51 // pred_fallthru
          _
      $region52: #{tpu_custom_call.1} parent=5 // pred_fallthru
        _
    $region6: #{tpu_custom_call.1} parent=1 // loop_footer
      %s19 = sadd.s32 1, %s15
    $region7: #{tpu_custom_call.1} parent=1 // loop_footer_branch
      %14 = sbr.rel target = $region3
    $region8: #{tpu_custom_call.1} parent=1 // loop_exit
      _
    %752 = vsyncpa [#allocation3], 1
    %s753 = scalar_lea.sflag [#allocation3], 1
    %754 = vsyncpa %s753, 1

</llo_original>
